<compile_context>
chip_gen: v7x
topology: tpu7x:2x2x1
jax: 0.10.0
libtpu: 0.0.40
codegen_flags: <defaults>
</compile_context>

<pallas_src>
import functools

import jax
import jax.numpy as jnp
from jax.experimental import pallas as pl
from jax.experimental.pallas import tpu as pltpu


def ffn_kernel(x_ref, w1_ref, b1_ref, w2_ref, b2_ref, o_ref, acc_ref):
    k = pl.program_id(1)

    @pl.when(k == 0)
    def _():
        acc_ref[...] = jnp.zeros_like(acc_ref)

    # fc_1 chunk on the MXU (bf16 inputs, f32 accumulation); bias + ReLU in f32.
    x = x_ref[...].astype(w1_ref.dtype)                       # f32 -> bf16 in-kernel
    h = jnp.dot(x, w1_ref[...], preferred_element_type=jnp.float32)
    h = jnp.maximum(h + b1_ref[...], 0.0)                     # (tile_m, tk) f32
    # (dropout == identity in eval mode)
    # fc_2 chunk, accumulated in f32 VMEM scratch.
    acc_ref[...] += jnp.dot(h.astype(w2_ref.dtype), w2_ref[...],
                            preferred_element_type=jnp.float32)

    @pl.when(k == pl.num_programs(1) - 1)
    def _():
        o_ref[...] = (acc_ref[...] + b2_ref[...]).astype(o_ref.dtype)


def _round_up(v, m):
    return ((v + m - 1) // m) * m


def _pick_pf_chunk(pf, target):
    """Largest 128-multiple chunk <= target that divides pf; else the full pf."""
    if pf <= target or pf % 128 != 0:
        return pf
    for c in range(target - target % 128, 127, -128):
        if pf % c == 0:
            return c
    return pf


def _vmem_limit_bytes():
    # ~75% of physical VMEM leaves headroom for compiler scratch / semaphores:
    # v7x -> 48 of 64 MiB, v5e/v6e -> 96 of 128 MiB.
    try:
        return int(pltpu.get_tpu_info().vmem_capacity_bytes * 3 // 4)
    except Exception:
        return None


@functools.partial(
    jax.jit,
    static_argnames=("tile_m", "pf_chunk", "use_single_buffering", "out_dtype"))
def positionwise_ffn(x, w1, b1, w2, b2, *, tile_m=512, pf_chunk=512,
                     use_single_buffering=True, out_dtype=None):
    """x: (batch, seq, hid). w1: (hid, pf), b1: (pf,), w2: (pf, hid), b2: (hid,).

    Weights are stored pre-transposed relative to torch.nn.Linear (as (in, out))
    so the kernel computes plain row-major matmuls. Dropout is the identity
    (eval mode).
    """
    batch, seq, hid = x.shape
    pf = w1.shape[1]
    M = batch * seq
    out_dtype = x.dtype if out_dtype is None else out_dtype

    # Row tiling: one full-extent block for small M (no row padding at all),
    # otherwise a multiple-of-8 tile with rows padded up to a tile multiple.
    if M <= tile_m:
        tile_m = M
        M_p = M
    else:
        tile_m = _round_up(tile_m, 8)
        M_p = _round_up(M, tile_m)

    # pf (K) chunking: stream W1/W2 in 128-multiple chunks, accumulate in f32.
    tk = _pick_pf_chunk(pf, pf_chunk)
    num_k = pf // tk

    x2d = x.reshape(M, hid)
    if M_p != M:
        x2d = jnp.pad(x2d, ((0, M_p - M), (0, 0)))   # zero rows, sliced off below

    # Weights cast to bf16 once (parameters; store them bf16 upstream to skip
    # this pass entirely). Biases stay f32 and are added in the f32 epilogue.
    w1b = w1.astype(jnp.bfloat16)
    w2b = w2.astype(jnp.bfloat16)
    b1f = b1.reshape(1, pf).astype(jnp.float32)
    b2f = b2.reshape(1, hid).astype(jnp.float32)

    grid = (M_p // tile_m, num_k)

    # Single-buffer operands whose block index never changes (DMA'd once,
    # resident); keep default double buffering for streamed ones.
    resident_w = use_single_buffering and num_k == 1
    w_mode = pl.Buffered(1) if resident_w else None
    b2_mode = pl.Buffered(1) if use_single_buffering else None

    def spec(shape, imap, mode=None):
        if mode is None:
            return pl.BlockSpec(shape, imap)
        return pl.BlockSpec(shape, imap, pipeline_mode=mode)

    in_specs = [
        spec((tile_m, hid), lambda i, k: (i, 0)),        # x row tile (constant over k)
        spec((hid, tk), lambda i, k: (0, k), w_mode),    # W1 chunk
        spec((1, tk), lambda i, k: (0, k), w_mode),      # b1 chunk
        spec((tk, hid), lambda i, k: (k, 0), w_mode),    # W2 chunk
        spec((1, hid), lambda i, k: (0, 0), b2_mode),    # b2 (always resident)
    ]

    out_bytes = jnp.dtype(out_dtype).itemsize
    flops = 4 * M_p * hid * pf                  # two matmuls: 2*M*hid*pf each
    bytes_accessed = (x2d.size * x2d.dtype.itemsize
                      + w1b.size * 2 + w2b.size * 2
                      + b1f.size * 4 + b2f.size * 4
                      + M_p * hid * out_bytes)
    cost = pl.CostEstimate(flops=flops, transcendentals=0,
                           bytes_accessed=int(bytes_accessed))

    out2d = pl.pallas_call(
        ffn_kernel,
        out_shape=jax.ShapeDtypeStruct((M_p, hid), out_dtype),
        grid_spec=pltpu.PrefetchScalarGridSpec(
            num_scalar_prefetch=0,
            grid=grid,
            in_specs=in_specs,
            out_specs=pl.BlockSpec((tile_m, hid), lambda i, k: (i, 0)),
            scratch_shapes=[pltpu.VMEM((tile_m, hid), jnp.float32)],
        ),
        compiler_params=pltpu.CompilerParams(
            dimension_semantics=("parallel", "arbitrary"),
            vmem_limit_bytes=_vmem_limit_bytes(),
        ),
        cost_estimate=cost,
    )(x2d, w1b, b1f, w2b, b2f)

    if M_p != M:
        out2d = out2d[:M]
    return out2d.reshape(batch, seq, hid)


if __name__ == "__main__":
    # Small, deterministic setup consistent with the module:
    #   hid_dim=32, pf_dim=64, batch=2, seq=8
    batch, seq, hid_dim, pf_dim = 2, 8, 32, 64

    key = jax.random.PRNGKey(0)
    kx, kw1, kb1, kw2, kb2 = jax.random.split(key, 5)

    x = jax.random.normal(kx, (batch, seq, hid_dim), dtype=jnp.float32)
    # nn.Linear(hid, pf): weight (pf, hid), bias (pf,). Stored transposed (hid, pf).
    w1 = jax.random.normal(kw1, (hid_dim, pf_dim), dtype=jnp.float32) * 0.1
    b1 = jax.random.normal(kb1, (pf_dim,), dtype=jnp.float32) * 0.1
    # nn.Linear(pf, hid): weight (hid, pf), bias (hid,). Stored transposed (pf, hid).
    w2 = jax.random.normal(kw2, (pf_dim, hid_dim), dtype=jnp.float32) * 0.1
    b2 = jax.random.normal(kb2, (hid_dim,), dtype=jnp.float32) * 0.1

    try:
        out = jax.block_until_ready(positionwise_ffn(x, w1, b1, w2, b2))
    except Exception:
        # Fallback if this jax build rejects BlockSpec pipeline_mode
        # single-buffering; identical math, default double buffering.
        out = jax.block_until_ready(
            positionwise_ffn(x, w1, b1, w2, b2, use_single_buffering=False))

    assert out.shape == (batch, seq, hid_dim)
    assert out.dtype == jnp.float32

    # Reference using the same bf16-input / f32-accumulation recipe (dropout = identity).
    xb = x.reshape(-1, hid_dim).astype(jnp.bfloat16)
    h_ref = jnp.maximum(
        jnp.dot(xb, w1.astype(jnp.bfloat16), preferred_element_type=jnp.float32) + b1,
        0.0)
    ref = jnp.dot(h_ref.astype(jnp.bfloat16), w2.astype(jnp.bfloat16),
                  preferred_element_type=jnp.float32) + b2
    ref = ref.reshape(batch, seq, hid_dim)
    assert jnp.allclose(out, ref, atol=1e-2, rtol=1e-2)

    # Loose sanity check against the pure-f32 math as well.
    ref_f32 = jnp.maximum(x.reshape(-1, hid_dim) @ w1 + b1, 0.0) @ w2 + b2
    ref_f32 = ref_f32.reshape(batch, seq, hid_dim)
    assert jnp.allclose(out, ref_f32, atol=5e-2, rtol=5e-2)

    print("KERNEL_OK")
</pallas_src>

<mosaic_0001>
module attributes {stable_mosaic.version = 11 : i64} {
  func.func @ffn_kernel(%arg0: i32, %arg1: i32, %arg2: memref<16x32xf32, #tpu.memory_space<vmem>>, %arg3: memref<32x64xbf16, #tpu.memory_space<vmem>>, %arg4: memref<1x64xf32, #tpu.memory_space<vmem>>, %arg5: memref<64x32xbf16, #tpu.memory_space<vmem>>, %arg6: memref<1x32xf32, #tpu.memory_space<vmem>>, %arg7: memref<16x32xf32, #tpu.memory_space<vmem>>, %arg8: memref<16x32xf32, #tpu.memory_space<vmem>>) attributes {dimension_semantics = [#tpu.dimension_semantics<parallel>, #tpu.dimension_semantics<arbitrary>], iteration_bounds = array<i64: 1, 1>, scalar_prefetch = 0 : i64, scratch_operands = 1 : i64, tpu.core_type = #tpu.core_type<tc>, window_params = [{transform_indices = @transform_0, window_bounds = array<i64: 16, 32>}, {pipeline_mode = #tpu.pipeline_mode<synchronous>, transform_indices = @transform_1, window_bounds = array<i64: 32, 64>}, {pipeline_mode = #tpu.pipeline_mode<synchronous>, transform_indices = @transform_2, window_bounds = array<i64: 1, 64>}, {pipeline_mode = #tpu.pipeline_mode<synchronous>, transform_indices = @transform_3, window_bounds = array<i64: 64, 32>}, {pipeline_mode = #tpu.pipeline_mode<synchronous>, transform_indices = @transform_4, window_bounds = array<i64: 1, 32>}, {transform_indices = @transform_5, window_bounds = array<i64: 16, 32>}]} {
    %c0_i32 = arith.constant 0 : i32
    %0 = arith.cmpi eq, %arg1, %c0_i32 : i32
    %1 = arith.extui %0 : i1 to i32
    %c0_i32_0 = arith.constant 0 : i32
    %2 = arith.cmpi ne, %1, %c0_i32_0 : i32
    scf.if %2 {
      %cst_16 = arith.constant 0.000000e+00 : f32
      %21 = vector.broadcast %cst_16 : f32 to vector<16x32xf32>
      %c0_17 = arith.constant 0 : index
      %c0_18 = arith.constant 0 : index
      %22 = vector.load %arg8[%c0_17, %c0_18] : memref<16x32xf32, #tpu.memory_space<vmem>>, vector<16x32xf32>
      tpu.vector_store %arg8[%c0_17, %c0_18], %21 {strides = array<i32>} : memref<16x32xf32, #tpu.memory_space<vmem>>, vector<16x32xf32>,
    } else {
    }
    %c0 = arith.constant 0 : index
    %c0_1 = arith.constant 0 : index
    %3 = vector.load %arg2[%c0, %c0_1] : memref<16x32xf32, #tpu.memory_space<vmem>>, vector<16x32xf32>
    %4 = arith.truncf %3 : vector<16x32xf32> to vector<16x32xbf16>
    %c0_2 = arith.constant 0 : index
    %c0_3 = arith.constant 0 : index
    %5 = vector.load %arg3[%c0_2, %c0_3] : memref<32x64xbf16, #tpu.memory_space<vmem>>, vector<32x64xbf16>
    %cst = arith.constant dense<0.000000e+00> : vector<16x64xf32>
    %6 = tpu.matmul %4, %5, %cst {dimension_numbers = #tpu.dot_dimension_numbers<[1], [0], [0], [1], [0, 0, 1, 1], [], []>} : vector<16x32xbf16>, vector<32x64xbf16>, vector<16x64xf32> -> vector<16x64xf32>
    %c0_4 = arith.constant 0 : index
    %c0_5 = arith.constant 0 : index
    %7 = vector.load %arg4[%c0_4, %c0_5] : memref<1x64xf32, #tpu.memory_space<vmem>>, vector<1x64xf32>
    %8 = vector.broadcast %7 : vector<1x64xf32> to vector<16x64xf32>
    %9 = arith.addf %6, %8 : vector<16x64xf32>
    %cst_6 = arith.constant 0.000000e+00 : f32
    %10 = vector.broadcast %cst_6 : f32 to vector<16x64xf32>
    %11 = arith.maximumf %9, %10 : vector<16x64xf32>
    %c0_7 = arith.constant 0 : index
    %c0_8 = arith.constant 0 : index
    %12 = vector.load %arg8[%c0_7, %c0_8] : memref<16x32xf32, #tpu.memory_space<vmem>>, vector<16x32xf32>
    %13 = arith.truncf %11 : vector<16x64xf32> to vector<16x64xbf16>
    %c0_9 = arith.constant 0 : index
    %c0_10 = arith.constant 0 : index
    %14 = vector.load %arg5[%c0_9, %c0_10] : memref<64x32xbf16, #tpu.memory_space<vmem>>, vector<64x32xbf16>
    %cst_11 = arith.constant dense<0.000000e+00> : vector<16x32xf32>
    %15 = tpu.matmul %13, %14, %cst_11 {dimension_numbers = #tpu.dot_dimension_numbers<[1], [0], [0], [1], [0, 0, 1, 1], [], []>} : vector<16x64xbf16>, vector<64x32xbf16>, vector<16x32xf32> -> vector<16x32xf32>
    %16 = arith.addf %12, %15 : vector<16x32xf32>
    %c0_12 = arith.constant 0 : index
    %c0_13 = arith.constant 0 : index
    %17 = vector.load %arg8[%c0_12, %c0_13] : memref<16x32xf32, #tpu.memory_space<vmem>>, vector<16x32xf32>
    tpu.vector_store %arg8[%c0_12, %c0_13], %16 {strides = array<i32>} : memref<16x32xf32, #tpu.memory_space<vmem>>, vector<16x32xf32>,
    %c0_i32_14 = arith.constant 0 : i32
    %18 = arith.cmpi eq, %arg1, %c0_i32_14 : i32
    %19 = arith.extui %18 : i1 to i32
    %c0_i32_15 = arith.constant 0 : i32
    %20 = arith.cmpi ne, %19, %c0_i32_15 : i32
    scf.if %20 {
      %c0_16 = arith.constant 0 : index
      %c0_17 = arith.constant 0 : index
      %21 = vector.load %arg8[%c0_16, %c0_17] : memref<16x32xf32, #tpu.memory_space<vmem>>, vector<16x32xf32>
      %c0_18 = arith.constant 0 : index
      %c0_19 = arith.constant 0 : index
      %22 = vector.load %arg6[%c0_18, %c0_19] : memref<1x32xf32, #tpu.memory_space<vmem>>, vector<1x32xf32>
      %23 = vector.broadcast %22 : vector<1x32xf32> to vector<16x32xf32>
      %24 = arith.addf %21, %23 : vector<16x32xf32>
      %c0_20 = arith.constant 0 : index
      %c0_21 = arith.constant 0 : index
      %25 = vector.load %arg7[%c0_20, %c0_21] : memref<16x32xf32, #tpu.memory_space<vmem>>, vector<16x32xf32>
      tpu.vector_store %arg7[%c0_20, %c0_21], %24 {strides = array<i32>} : memref<16x32xf32, #tpu.memory_space<vmem>>, vector<16x32xf32>,
    } else {
    }
    return
  }
  func.func @transform_0(%arg0: i32, %arg1: i32) -> (i32, i32) {
    %c0_i32 = arith.constant 0 : i32
    %c0_i32_0 = arith.constant 0 : i32
    return %arg0, %c0_i32 : i32, i32
  }
  func.func @transform_1(%arg0: i32, %arg1: i32) -> (i32, i32) {
    %c0_i32 = arith.constant 0 : i32
    %c0_i32_0 = arith.constant 0 : i32
    return %c0_i32, %arg1 : i32, i32
  }
  func.func @transform_2(%arg0: i32, %arg1: i32) -> (i32, i32) {
    %c0_i32 = arith.constant 0 : i32
    %c0_i32_0 = arith.constant 0 : i32
    return %c0_i32, %arg1 : i32, i32
  }
  func.func @transform_3(%arg0: i32, %arg1: i32) -> (i32, i32) {
    %c0_i32 = arith.constant 0 : i32
    %c0_i32_0 = arith.constant 0 : i32
    return %arg1, %c0_i32 : i32, i32
  }
  func.func @transform_4(%arg0: i32, %arg1: i32) -> (i32, i32) {
    %c0_i32 = arith.constant 0 : i32
    %c0_i32_0 = arith.constant 0 : i32
    %c0_i32_1 = arith.constant 0 : i32
    return %c0_i32, %c0_i32_0 : i32, i32
  }
  func.func @transform_5(%arg0: i32, %arg1: i32) -> (i32, i32) {
    %c0_i32 = arith.constant 0 : i32
    %c0_i32_0 = arith.constant 0 : i32
    return %arg0, %c0_i32 : i32, i32
  }
}

module attributes {stable_mosaic.version = 11 : i64} {
  func.func @ffn_kernel(%arg0: i32, %arg1: i32, %arg2: memref<16x32xf32, #tpu.memory_space<vmem>>, %arg3: memref<32x64xbf16, #tpu.memory_space<vmem>>, %arg4: memref<1x64xf32, #tpu.memory_space<vmem>>, %arg5: memref<64x32xbf16, #tpu.memory_space<vmem>>, %arg6: memref<1x32xf32, #tpu.memory_space<vmem>>, %arg7: memref<16x32xf32, #tpu.memory_space<vmem>>, %arg8: memref<16x32xf32, #tpu.memory_space<vmem>>) attributes {dimension_semantics = [#tpu.dimension_semantics<parallel>, #tpu.dimension_semantics<arbitrary>], iteration_bounds = array<i64: 1, 1>, scalar_prefetch = 0 : i64, scratch_operands = 1 : i64, tpu.core_type = #tpu.core_type<tc>, window_params = [{transform_indices = @transform_0, window_bounds = array<i64: 16, 32>}, {transform_indices = @transform_1, window_bounds = array<i64: 32, 64>}, {transform_indices = @transform_2, window_bounds = array<i64: 1, 64>}, {transform_indices = @transform_3, window_bounds = array<i64: 64, 32>}, {pipeline_mode = #tpu.pipeline_mode<synchronous>, transform_indices = @transform_4, window_bounds = array<i64: 1, 32>}, {transform_indices = @transform_5, window_bounds = array<i64: 16, 32>}]} {
    %c0_i32 = arith.constant 0 : i32
    %0 = arith.cmpi eq, %arg1, %c0_i32 : i32
    %1 = arith.extui %0 : i1 to i32
    %c0_i32_0 = arith.constant 0 : i32
    %2 = arith.cmpi ne, %1, %c0_i32_0 : i32
    scf.if %2 {
      %cst_16 = arith.constant 0.000000e+00 : f32
      %21 = vector.broadcast %cst_16 : f32 to vector<16x32xf32>
      %c0_17 = arith.constant 0 : index
      %c0_18 = arith.constant 0 : index
      %22 = vector.load %arg8[%c0_17, %c0_18] : memref<16x32xf32, #tpu.memory_space<vmem>>, vector<16x32xf32>
      tpu.vector_store %arg8[%c0_17, %c0_18], %21 {strides = array<i32>} : memref<16x32xf32, #tpu.memory_space<vmem>>, vector<16x32xf32>,
    } else {
    }
    %c0 = arith.constant 0 : index
    %c0_1 = arith.constant 0 : index
    %3 = vector.load %arg2[%c0, %c0_1] : memref<16x32xf32, #tpu.memory_space<vmem>>, vector<16x32xf32>
    %4 = arith.truncf %3 : vector<16x32xf32> to vector<16x32xbf16>
    %c0_2 = arith.constant 0 : index
    %c0_3 = arith.constant 0 : index
    %5 = vector.load %arg3[%c0_2, %c0_3] : memref<32x64xbf16, #tpu.memory_space<vmem>>, vector<32x64xbf16>
    %cst = arith.constant dense<0.000000e+00> : vector<16x64xf32>
    %6 = tpu.matmul %4, %5, %cst {dimension_numbers = #tpu.dot_dimension_numbers<[1], [0], [0], [1], [0, 0, 1, 1], [], []>} : vector<16x32xbf16>, vector<32x64xbf16>, vector<16x64xf32> -> vector<16x64xf32>
    %c0_4 = arith.constant 0 : index
    %c0_5 = arith.constant 0 : index
    %7 = vector.load %arg4[%c0_4, %c0_5] : memref<1x64xf32, #tpu.memory_space<vmem>>, vector<1x64xf32>
    %8 = vector.broadcast %7 : vector<1x64xf32> to vector<16x64xf32>
    %9 = arith.addf %6, %8 : vector<16x64xf32>
    %cst_6 = arith.constant 0.000000e+00 : f32
    %10 = vector.broadcast %cst_6 : f32 to vector<16x64xf32>
    %11 = arith.maximumf %9, %10 : vector<16x64xf32>
    %c0_7 = arith.constant 0 : index
    %c0_8 = arith.constant 0 : index
    %12 = vector.load %arg8[%c0_7, %c0_8] : memref<16x32xf32, #tpu.memory_space<vmem>>, vector<16x32xf32>
    %13 = arith.truncf %11 : vector<16x64xf32> to vector<16x64xbf16>
    %c0_9 = arith.constant 0 : index
    %c0_10 = arith.constant 0 : index
    %14 = vector.load %arg5[%c0_9, %c0_10] : memref<64x32xbf16, #tpu.memory_space<vmem>>, vector<64x32xbf16>
    %cst_11 = arith.constant dense<0.000000e+00> : vector<16x32xf32>
    %15 = tpu.matmul %13, %14, %cst_11 {dimension_numbers = #tpu.dot_dimension_numbers<[1], [0], [0], [1], [0, 0, 1, 1], [], []>} : vector<16x64xbf16>, vector<64x32xbf16>, vector<16x32xf32> -> vector<16x32xf32>
    %16 = arith.addf %12, %15 : vector<16x32xf32>
    %c0_12 = arith.constant 0 : index
    %c0_13 = arith.constant 0 : index
    %17 = vector.load %arg8[%c0_12, %c0_13] : memref<16x32xf32, #tpu.memory_space<vmem>>, vector<16x32xf32>
    tpu.vector_store %arg8[%c0_12, %c0_13], %16 {strides = array<i32>} : memref<16x32xf32, #tpu.memory_space<vmem>>, vector<16x32xf32>,
    %c0_i32_14 = arith.constant 0 : i32
    %18 = arith.cmpi eq, %arg1, %c0_i32_14 : i32
    %19 = arith.extui %18 : i1 to i32
    %c0_i32_15 = arith.constant 0 : i32
    %20 = arith.cmpi ne, %19, %c0_i32_15 : i32
    scf.if %20 {
      %c0_16 = arith.constant 0 : index
      %c0_17 = arith.constant 0 : index
      %21 = vector.load %arg8[%c0_16, %c0_17] : memref<16x32xf32, #tpu.memory_space<vmem>>, vector<16x32xf32>
      %c0_18 = arith.constant 0 : index
      %c0_19 = arith.constant 0 : index
      %22 = vector.load %arg6[%c0_18, %c0_19] : memref<1x32xf32, #tpu.memory_space<vmem>>, vector<1x32xf32>
      %23 = vector.broadcast %22 : vector<1x32xf32> to vector<16x32xf32>
      %24 = arith.addf %21, %23 : vector<16x32xf32>
      %c0_20 = arith.constant 0 : index
      %c0_21 = arith.constant 0 : index
      %25 = vector.load %arg7[%c0_20, %c0_21] : memref<16x32xf32, #tpu.memory_space<vmem>>, vector<16x32xf32>
      tpu.vector_store %arg7[%c0_20, %c0_21], %24 {strides = array<i32>} : memref<16x32xf32, #tpu.memory_space<vmem>>, vector<16x32xf32>,
    } else {
    }
    return
  }
  func.func @transform_0(%arg0: i32, %arg1: i32) -> (i32, i32) {
    %c0_i32 = arith.constant 0 : i32
    %c0_i32_0 = arith.constant 0 : i32
    return %arg0, %c0_i32 : i32, i32
  }
  func.func @transform_1(%arg0: i32, %arg1: i32) -> (i32, i32) {
    %c0_i32 = arith.constant 0 : i32
    %c0_i32_0 = arith.constant 0 : i32
    return %c0_i32, %arg1 : i32, i32
  }
  func.func @transform_2(%arg0: i32, %arg1: i32) -> (i32, i32) {
    %c0_i32 = arith.constant 0 : i32
    %c0_i32_0 = arith.constant 0 : i32
    return %c0_i32, %arg1 : i32, i32
  }
  func.func @transform_3(%arg0: i32, %arg1: i32) -> (i32, i32) {
    %c0_i32 = arith.constant 0 : i32
    %c0_i32_0 = arith.constant 0 : i32
    return %arg1, %c0_i32 : i32, i32
  }
  func.func @transform_4(%arg0: i32, %arg1: i32) -> (i32, i32) {
    %c0_i32 = arith.constant 0 : i32
    %c0_i32_0 = arith.constant 0 : i32
    %c0_i32_1 = arith.constant 0 : i32
    return %c0_i32, %c0_i32_0 : i32, i32
  }
  func.func @transform_5(%arg0: i32, %arg1: i32) -> (i32, i32) {
    %c0_i32 = arith.constant 0 : i32
    %c0_i32_0 = arith.constant 0 : i32
    return %arg0, %c0_i32 : i32, i32
  }
}

</mosaic_0001>

<llo_original>
// kernel: positionwise_ffn.1
$region0: #{positionwise_ffn.1}
  #allocation0 [shape = 'u32[]', space=smem, size = 0x4, offset = 0x4, fixed_abs, tag = 'smem constant byte address 0x4 - core index']
  #allocation1 [shape = 'u32[144,128]{1,0:T(1,128)}', space=vmem, size = 0x12000, scoped, tag = 'internal scratch']
  #allocation2 [shape = 'f32[16,32]{1,0:T(8,128)}', space=vmem, size = 0x2000, scoped, tag = 'scratch operand']
  %s0 = inlined_call_operand.vmem [shape: f32[16,32], index: 0, kind: input, shape index: {}]
  %s1 = inlined_call_operand.vmem [shape: bf16[32,64], index: 1, kind: input, shape index: {}]
  %s2 = inlined_call_operand.vmem [shape: f32[1,64], index: 2, kind: input, shape index: {}]
  %s3 = inlined_call_operand.vmem [shape: bf16[64,32], index: 3, kind: input, shape index: {}]
  %s4 = inlined_call_operand.vmem [shape: f32[1,32], index: 4, kind: input, shape index: {}]
  %s5 = inlined_call_operand.hbm [shape: f32[16,32], index: 5, kind: output, shape index: {}]
  %s6 = sld [smem:[#allocation0]]
  $region38: #{positionwise_ffn.1} parent=0
    _
  %s8 = ssub.s32 1, %s6
  %s9 = scalar_select 0, %s8, %s6
  $region1: #{positionwise_ffn.1} parent=0
    #allocation3 [shape = 'u8[8192]{0}', space=vmem, size = 0x2000, scoped, tag = 'output window, operand 0, single buffered']
    #allocation4 [shape = 's32[1]{0}', space=sflag, size = 0x4, scoped, tag = 'scoped memory for positionwise_ffn.1']
    %10 = vsyncpa [#allocation4], 0
    // Predicated region
    $region2: #{positionwise_ffn.1} parent=1 // pred_check
      _
    $region3: #{positionwise_ffn.1} parent=1 // pred_check_branch
      %12 = sbr.rel (0) target = $region5
    $region4: #{positionwise_ffn.1} parent=1 // pred_region
      _
    $region5: #{positionwise_ffn.1} parent=1 // pred_fallthru
      _
    // Predicated region
    $region6: #{positionwise_ffn.1} parent=1 // pred_check
      _
    $region7: #{positionwise_ffn.1} parent=1 // pred_check_branch
      %14 = sbr.rel (0) target = $region9
    $region8: #{positionwise_ffn.1} parent=1 // pred_region
      _
    $region9: #{positionwise_ffn.1} parent=1 // pred_fallthru
      _
    // Predicated region
    $region10: #{positionwise_ffn.1} parent=1 // pred_check
      _
    $region11: #{positionwise_ffn.1} parent=1 // pred_check_branch
      %16 = sbr.rel (0) target = $region13
    $region12: #{positionwise_ffn.1} parent=1 // pred_region
      _
    $region13: #{positionwise_ffn.1} parent=1 // pred_fallthru
      _
    // Predicated region
    $region14: #{positionwise_ffn.1} parent=1 // pred_check
      _
    $region15: #{positionwise_ffn.1} parent=1 // pred_check_branch
      %18 = sbr.rel (0) target = $region17
    $region16: #{positionwise_ffn.1} parent=1 // pred_region
      _
    $region17: #{positionwise_ffn.1} parent=1 // pred_fallthru
      _
    // Predicated region
    $region18: #{positionwise_ffn.1} parent=1 // pred_check
      _
    $region19: #{positionwise_ffn.1} parent=1 // pred_check_branch
      %20 = sbr.rel (0) target = $region21
    $region20: #{positionwise_ffn.1} parent=1 // pred_region
      _
    $region21: #{positionwise_ffn.1} parent=1 // pred_fallthru
      _
    %p22 = scmp.eq.s32.totalorder 0, 0
    // Predicated region
    $region22: #{positionwise_ffn.1} parent=1 // pred_check
      %p23 = pneg %p22
    $region23: #{positionwise_ffn.1} parent=1 // pred_check_branch
      %25 = sbr.rel (%p23) target = $region25
    $region24: #{positionwise_ffn.1} parent=1 // pred_region
      %vm26 = vcmask 261120
      %27 = vst.msk [vmem:[#allocation2] sm:$0xff] %vm26, 0.0
      %28 = vst.msk [vmem:[#allocation2 + $0x8] sm:$0xff] %vm26, 0.0
    $region25: #{positionwise_ffn.1} parent=1 // pred_fallthru
      _
    %v29 = vld [vmem:[%s0] sm:$0xff]
    %v30 = vld [vmem:[%s0 + $0x8] sm:$0xff]
    %v31 = vpack.c.bf16 %v30, %v29
    %v32 = vld [vmem:[%s1] sm:$0xf]
    %v33 = vld [vmem:[%s1 + $0x4] sm:$0xf]
    %v34 = vld [vmem:[%s1 + $0x8] sm:$0xf]
    %v35 = vld [vmem:[%s1 + $0xc] sm:$0xf]
    %v36 = vld [vmem:[%s2] sm:$0x1]
    %v38 = vlaneseq
    %v39 = vshrl.u32 %v38, 7
    %v40 = vsub.s32 0, %v39
    %v41 = vrot.slane %v36, %v40
    %v47 = vunpack.c.l.b16 %v32
    %v48 = vunpack.c.l.b16 %v33
    %v49 = vunpack.c.l.b16 %v34
    %v50 = vunpack.c.l.b16 %v35
    %v51 = vpack.c.b16 %v48, %v47
    %v52 = vpack.c.b16 %v50, %v49
    %vm55 = vcmask 261120
    %v57 = vsel %vm55, %v31, 0
    %59 = vmatprep.subr.bf16.mxu0 0
    %60 = vmatpush1.bf16.msra.mxu0 %v51
    %61 = vmatprep.subr.bf16.mxu0 0
    %62 = vmatpush1.bf16.msra.mxu0 %v52
    %63 = vmatprep.subr.bf16.mxu0 0
    %64 = vmatpush1.bf16.msra.mxu0 0
    %65 = vmatprep.subr.bf16.mxu0 0
    %66 = vmatpush1.bf16.msra.mxu0 0
    %67 = vmatprep.subr.bf16.mxu0 0
    %68 = vmatpush1.bf16.msra.mxu0 0
    %69 = vmatprep.subr.bf16.mxu0 0
    %70 = vmatpush1.bf16.msra.mxu0 0
    %71 = vmatprep.subr.bf16.mxu0 0
    %72 = vmatpush1.bf16.msra.mxu0 0
    %73 = vmatprep.subr.bf16.mxu0 0
    %74 = vmatpush1.bf16.msra.mxu0 0
    %75 = vmatprep.subr.bf16.mxu0 0
    %76 = vmatpush1.bf16.msra.mxu0 0
    %77 = vmatprep.subr.bf16.mxu0 0
    %78 = vmatpush1.bf16.msra.mxu0 0
    %79 = vmatprep.subr.bf16.mxu0 0
    %80 = vmatpush1.bf16.msra.mxu0 0
    %81 = vmatprep.subr.bf16.mxu0 0
    %82 = vmatpush1.bf16.msra.mxu0 0
    %83 = vmatprep.subr.bf16.mxu0 0
    %84 = vmatpush1.bf16.msra.mxu0 0
    %85 = vmatprep.subr.bf16.mxu0 0
    %86 = vmatpush1.bf16.msra.mxu0 0
    %87 = vmatprep.subr.bf16.mxu0 0
    %88 = vmatpush1.bf16.msra.mxu0 0
    %89 = vmatprep.subr.bf16.mxu0 0
    %90 = vmatpush1.bf16.msra.mxu0 0
    %91 = vmatprep.mubr.bf16.mxu0 0
    %92 = vmatmul.mubr.bf16.gmra.mrb[0].mxu0 %v57
    %v93 = vpop.f32.mrb[0].mxu0
    %v94 = vadd.f32 %v41, %v93
    %v95 = vpop.f32.mrb[0].mxu0
    %v96 = vpop.f32.mrb[0].mxu0
    %v97 = vadd.f32 %v41, %v96
    %v98 = vpop.f32.mrb[0].mxu0
    %99 = vdwg.mxu0
    %v100 = vmax.f32 %v94, 0.0
    %v101 = vmax.f32 %v97, 0.0
    %v102 = vld [vmem:[#allocation2] sm:$0xff]
    %v103 = vld [vmem:[#allocation2 + $0x8] sm:$0xff]
    %v104 = vpack.c.bf16 %v101, %v100
    %v105 = vld [vmem:[%s3] sm:$0xf]
    %v106 = vld [vmem:[%s3 + $0x4] sm:$0xf]
    %v107 = vld [vmem:[%s3 + $0x8] sm:$0xf]
    %v108 = vld [vmem:[%s3 + $0xc] sm:$0xf]
    %v109 = vld [vmem:[%s3 + $0x10] sm:$0xf]
    %v110 = vld [vmem:[%s3 + $0x14] sm:$0xf]
    %v111 = vld [vmem:[%s3 + $0x18] sm:$0xf]
    %v112 = vld [vmem:[%s3 + $0x1c] sm:$0xf]
    %v121 = vunpack.c.l.b16 %v105
    %v122 = vunpack.c.l.b16 %v106
    %v123 = vunpack.c.l.b16 %v107
    %v124 = vunpack.c.l.b16 %v108
    %v125 = vunpack.c.l.b16 %v109
    %v126 = vunpack.c.l.b16 %v110
    %v127 = vunpack.c.l.b16 %v111
    %v128 = vunpack.c.l.b16 %v112
    %v129 = vpack.c.b16 %v122, %v121
    %v130 = vpack.c.b16 %v124, %v123
    %v131 = vpack.c.b16 %v126, %v125
    %v132 = vpack.c.b16 %v128, %v127
    %vm137 = vcmask 523264
    %v139 = vsel %vm137, %v104, 0
    %141 = vmatprep.subr.bf16.mxu0 0
    %142 = vmatpush1.bf16.msra.mxu0 %v129
    %143 = vmatprep.subr.bf16.mxu0 0
    %144 = vmatpush1.bf16.msra.mxu0 %v130
    %145 = vmatprep.subr.bf16.mxu0 0
    %146 = vmatpush1.bf16.msra.mxu0 %v131
    %147 = vmatprep.subr.bf16.mxu0 0
    %148 = vmatpush1.bf16.msra.mxu0 %v132
    %149 = vmatprep.subr.bf16.mxu0 0
    %150 = vmatpush1.bf16.msra.mxu0 0
    %151 = vmatprep.subr.bf16.mxu0 0
    %152 = vmatpush1.bf16.msra.mxu0 0
    %153 = vmatprep.subr.bf16.mxu0 0
    %154 = vmatpush1.bf16.msra.mxu0 0
    %155 = vmatprep.subr.bf16.mxu0 0
    %156 = vmatpush1.bf16.msra.mxu0 0
    %157 = vmatprep.subr.bf16.mxu0 0
    %158 = vmatpush1.bf16.msra.mxu0 0
    %159 = vmatprep.subr.bf16.mxu0 0
    %160 = vmatpush1.bf16.msra.mxu0 0
    %161 = vmatprep.subr.bf16.mxu0 0
    %162 = vmatpush1.bf16.msra.mxu0 0
    %163 = vmatprep.subr.bf16.mxu0 0
    %164 = vmatpush1.bf16.msra.mxu0 0
    %165 = vmatprep.subr.bf16.mxu0 0
    %166 = vmatpush1.bf16.msra.mxu0 0
    %167 = vmatprep.subr.bf16.mxu0 0
    %168 = vmatpush1.bf16.msra.mxu0 0
    %169 = vmatprep.subr.bf16.mxu0 0
    %170 = vmatpush1.bf16.msra.mxu0 0
    %171 = vmatprep.subr.bf16.mxu0 0
    %172 = vmatpush1.bf16.msra.mxu0 0
    %173 = vmatprep.mubr.bf16.mxu0 0
    %174 = vmatmul.mubr.bf16.gmra.mrb[0].mxu0 %v139
    %v175 = vpop.f32.mrb[0].mxu0
    %v176 = vadd.f32 0.0, %v175
    %v177 = vpop.f32.mrb[0].mxu0
    %v178 = vpop.f32.mrb[0].mxu0
    %v179 = vadd.f32 0.0, %v178
    %v180 = vpop.f32.mrb[0].mxu0
    %181 = vdwg.mxu0
    %v182 = vadd.f32 %v102, %v176
    %v183 = vadd.f32 %v103, %v179
    %184 = vst.msk [vmem:[#allocation2] sm:$0xff] %vm55, %v182
    %185 = vst.msk [vmem:[#allocation2 + $0x8] sm:$0xff] %vm55, %v183
    // Predicated region
    $region26: #{positionwise_ffn.1} parent=1 // pred_check
      %p186 = pneg %p22
    $region27: #{positionwise_ffn.1} parent=1 // pred_check_branch
      %188 = sbr.rel (%p186) target = $region29
    $region28: #{positionwise_ffn.1} parent=1 // pred_region
      %v189 = vld [vmem:[#allocation2] sm:$0xff]
      %v190 = vld [vmem:[#allocation2 + $0x8] sm:$0xff]
      %v191 = vld [vmem:[%s4] sm:$0x1]
      %v193 = vlaneseq
      %v194 = vshrl.u32 %v193, 7
      %v195 = vsub.s32 0, %v194
      %v196 = vrot.slane %v191, %v195
      %v198 = vadd.f32 %v189, %v196
      %v199 = vadd.f32 %v190, %v196
      %200 = vst.msk [vmem:[#allocation3] sm:$0xff] %vm55, %v198
      %201 = vst.msk [vmem:[#allocation3 + $0x8] sm:$0xff] %vm55, %v199
    $region29: #{positionwise_ffn.1} parent=1 // pred_fallthru
      _
    // Predicated region
    $region30: #{positionwise_ffn.1} parent=1 // pred_check
      _
    $region31: #{positionwise_ffn.1} parent=1 // pred_check_branch
      %203 = sbr.rel (0) target = $region33
    $region32: #{positionwise_ffn.1} parent=1 // pred_region
      %s205 = ssub.s32 256, 256
      %206 = vsyncadd [#allocation4], %s205
      %s207 = sshll.u32 [#allocation3], 4
      %s208 = int_to_ptr.vmem [resolvable:$true] %s207
      %213 = dma.vmem_to_hbm [thread:$0]  %s208, 256, %s5, [#allocation4], 128, 128, 8
    $region33: #{positionwise_ffn.1} parent=1 // pred_fallthru
      _
    // Predicated region
    $region34: #{positionwise_ffn.1} parent=1 // pred_check
      _
    $region35: #{positionwise_ffn.1} parent=1 // pred_check_branch
      %215 = sbr.rel (0) target = $region37
    $region36: #{positionwise_ffn.1} parent=1 // pred_region
      %216 = dma.done [#allocation4], 256
    $region37: #{positionwise_ffn.1} parent=1 // pred_fallthru
      _
    %217 = vsyncpa [#allocation4], 1

// kernel: positionwise_ffn.1
$region0: #{positionwise_ffn.1}
  #allocation0 [shape = 'u32[]', space=smem, size = 0x4, offset = 0x4, fixed_abs, tag = 'smem constant byte address 0x4 - core index']
  #allocation1 [shape = 'u32[144,128]{1,0:T(1,128)}', space=vmem, size = 0x12000, scoped, tag = 'internal scratch']
  #allocation2 [shape = 'f32[16,32]{1,0:T(8,128)}', space=vmem, size = 0x2000, scoped, tag = 'scratch operand']
  %s0 = inlined_call_operand.vmem [shape: f32[16,32], index: 0, kind: input, shape index: {}]
  %s1 = inlined_call_operand.vmem [shape: bf16[32,64], index: 1, kind: input, shape index: {}]
  %s2 = inlined_call_operand.vmem [shape: f32[1,64], index: 2, kind: input, shape index: {}]
  %s3 = inlined_call_operand.vmem [shape: bf16[64,32], index: 3, kind: input, shape index: {}]
  %s4 = inlined_call_operand.vmem [shape: f32[1,32], index: 4, kind: input, shape index: {}]
  %s5 = inlined_call_operand.hbm [shape: f32[16,32], index: 5, kind: output, shape index: {}]
  %s6 = sld [smem:[#allocation0]]
  $region38: #{positionwise_ffn.1} parent=0
    _
  %s8 = ssub.s32 1, %s6
  %s9 = scalar_select 0, %s8, %s6
  $region1: #{positionwise_ffn.1} parent=0
    #allocation3 [shape = 'u8[8192]{0}', space=vmem, size = 0x2000, scoped, tag = 'output window, operand 0, single buffered']
    #allocation4 [shape = 's32[1]{0}', space=sflag, size = 0x4, scoped, tag = 'scoped memory for positionwise_ffn.1']
    %10 = vsyncpa [#allocation4], 0
    // Predicated region
    $region2: #{positionwise_ffn.1} parent=1 // pred_check
      _
    $region3: #{positionwise_ffn.1} parent=1 // pred_check_branch
      %12 = sbr.rel (0) target = $region5
    $region4: #{positionwise_ffn.1} parent=1 // pred_region
      _
    $region5: #{positionwise_ffn.1} parent=1 // pred_fallthru
      _
    // Predicated region
    $region6: #{positionwise_ffn.1} parent=1 // pred_check
      _
    $region7: #{positionwise_ffn.1} parent=1 // pred_check_branch
      %14 = sbr.rel (0) target = $region9
    $region8: #{positionwise_ffn.1} parent=1 // pred_region
      _
    $region9: #{positionwise_ffn.1} parent=1 // pred_fallthru
      _
    // Predicated region
    $region10: #{positionwise_ffn.1} parent=1 // pred_check
      _
    $region11: #{positionwise_ffn.1} parent=1 // pred_check_branch
      %16 = sbr.rel (0) target = $region13
    $region12: #{positionwise_ffn.1} parent=1 // pred_region
      _
    $region13: #{positionwise_ffn.1} parent=1 // pred_fallthru
      _
    // Predicated region
    $region14: #{positionwise_ffn.1} parent=1 // pred_check
      _
    $region15: #{positionwise_ffn.1} parent=1 // pred_check_branch
      %18 = sbr.rel (0) target = $region17
    $region16: #{positionwise_ffn.1} parent=1 // pred_region
      _
    $region17: #{positionwise_ffn.1} parent=1 // pred_fallthru
      _
    // Predicated region
    $region18: #{positionwise_ffn.1} parent=1 // pred_check
      _
    $region19: #{positionwise_ffn.1} parent=1 // pred_check_branch
      %20 = sbr.rel (0) target = $region21
    $region20: #{positionwise_ffn.1} parent=1 // pred_region
      _
    $region21: #{positionwise_ffn.1} parent=1 // pred_fallthru
      _
    %p22 = scmp.eq.s32.totalorder 0, 0
    // Predicated region
    $region22: #{positionwise_ffn.1} parent=1 // pred_check
      %p23 = pneg %p22
    $region23: #{positionwise_ffn.1} parent=1 // pred_check_branch
      %25 = sbr.rel (%p23) target = $region25
    $region24: #{positionwise_ffn.1} parent=1 // pred_region
      %vm26 = vcmask 261120
      %27 = vst.msk [vmem:[#allocation2] sm:$0xff] %vm26, 0.0
      %28 = vst.msk [vmem:[#allocation2 + $0x8] sm:$0xff] %vm26, 0.0
    $region25: #{positionwise_ffn.1} parent=1 // pred_fallthru
      _
    %v29 = vld [vmem:[%s0] sm:$0xff]
    %v30 = vld [vmem:[%s0 + $0x8] sm:$0xff]
    %v31 = vpack.c.bf16 %v30, %v29
    %v32 = vld [vmem:[%s1] sm:$0xf]
    %v33 = vld [vmem:[%s1 + $0x4] sm:$0xf]
    %v34 = vld [vmem:[%s1 + $0x8] sm:$0xf]
    %v35 = vld [vmem:[%s1 + $0xc] sm:$0xf]
    %v36 = vld [vmem:[%s2] sm:$0x1]
    %v38 = vlaneseq
    %v39 = vshrl.u32 %v38, 7
    %v40 = vsub.s32 0, %v39
    %v41 = vrot.slane %v36, %v40
    %v47 = vunpack.c.l.b16 %v32
    %v48 = vunpack.c.l.b16 %v33
    %v49 = vunpack.c.l.b16 %v34
    %v50 = vunpack.c.l.b16 %v35
    %v51 = vpack.c.b16 %v48, %v47
    %v52 = vpack.c.b16 %v50, %v49
    %vm55 = vcmask 261120
    %v57 = vsel %vm55, %v31, 0
    %59 = vmatprep.subr.bf16.mxu0 0
    %60 = vmatpush1.bf16.msra.mxu0 %v51
    %61 = vmatprep.subr.bf16.mxu0 0
    %62 = vmatpush1.bf16.msra.mxu0 %v52
    %63 = vmatprep.subr.bf16.mxu0 0
    %64 = vmatpush1.bf16.msra.mxu0 0
    %65 = vmatprep.subr.bf16.mxu0 0
    %66 = vmatpush1.bf16.msra.mxu0 0
    %67 = vmatprep.subr.bf16.mxu0 0
    %68 = vmatpush1.bf16.msra.mxu0 0
    %69 = vmatprep.subr.bf16.mxu0 0
    %70 = vmatpush1.bf16.msra.mxu0 0
    %71 = vmatprep.subr.bf16.mxu0 0
    %72 = vmatpush1.bf16.msra.mxu0 0
    %73 = vmatprep.subr.bf16.mxu0 0
    %74 = vmatpush1.bf16.msra.mxu0 0
    %75 = vmatprep.subr.bf16.mxu0 0
    %76 = vmatpush1.bf16.msra.mxu0 0
    %77 = vmatprep.subr.bf16.mxu0 0
    %78 = vmatpush1.bf16.msra.mxu0 0
    %79 = vmatprep.subr.bf16.mxu0 0
    %80 = vmatpush1.bf16.msra.mxu0 0
    %81 = vmatprep.subr.bf16.mxu0 0
    %82 = vmatpush1.bf16.msra.mxu0 0
    %83 = vmatprep.subr.bf16.mxu0 0
    %84 = vmatpush1.bf16.msra.mxu0 0
    %85 = vmatprep.subr.bf16.mxu0 0
    %86 = vmatpush1.bf16.msra.mxu0 0
    %87 = vmatprep.subr.bf16.mxu0 0
    %88 = vmatpush1.bf16.msra.mxu0 0
    %89 = vmatprep.subr.bf16.mxu0 0
    %90 = vmatpush1.bf16.msra.mxu0 0
    %91 = vmatprep.mubr.bf16.mxu0 0
    %92 = vmatmul.mubr.bf16.gmra.mrb[0].mxu0 %v57
    %v93 = vpop.f32.mrb[0].mxu0
    %v94 = vadd.f32 %v41, %v93
    %v95 = vpop.f32.mrb[0].mxu0
    %v96 = vpop.f32.mrb[0].mxu0
    %v97 = vadd.f32 %v41, %v96
    %v98 = vpop.f32.mrb[0].mxu0
    %99 = vdwg.mxu0
    %v100 = vmax.f32 %v94, 0.0
    %v101 = vmax.f32 %v97, 0.0
    %v102 = vld [vmem:[#allocation2] sm:$0xff]
    %v103 = vld [vmem:[#allocation2 + $0x8] sm:$0xff]
    %v104 = vpack.c.bf16 %v101, %v100
    %v105 = vld [vmem:[%s3] sm:$0xf]
    %v106 = vld [vmem:[%s3 + $0x4] sm:$0xf]
    %v107 = vld [vmem:[%s3 + $0x8] sm:$0xf]
    %v108 = vld [vmem:[%s3 + $0xc] sm:$0xf]
    %v109 = vld [vmem:[%s3 + $0x10] sm:$0xf]
    %v110 = vld [vmem:[%s3 + $0x14] sm:$0xf]
    %v111 = vld [vmem:[%s3 + $0x18] sm:$0xf]
    %v112 = vld [vmem:[%s3 + $0x1c] sm:$0xf]
    %v121 = vunpack.c.l.b16 %v105
    %v122 = vunpack.c.l.b16 %v106
    %v123 = vunpack.c.l.b16 %v107
    %v124 = vunpack.c.l.b16 %v108
    %v125 = vunpack.c.l.b16 %v109
    %v126 = vunpack.c.l.b16 %v110
    %v127 = vunpack.c.l.b16 %v111
    %v128 = vunpack.c.l.b16 %v112
    %v129 = vpack.c.b16 %v122, %v121
    %v130 = vpack.c.b16 %v124, %v123
    %v131 = vpack.c.b16 %v126, %v125
    %v132 = vpack.c.b16 %v128, %v127
    %vm137 = vcmask 523264
    %v139 = vsel %vm137, %v104, 0
    %141 = vmatprep.subr.bf16.mxu0 0
    %142 = vmatpush1.bf16.msra.mxu0 %v129
    %143 = vmatprep.subr.bf16.mxu0 0
    %144 = vmatpush1.bf16.msra.mxu0 %v130
    %145 = vmatprep.subr.bf16.mxu0 0
    %146 = vmatpush1.bf16.msra.mxu0 %v131
    %147 = vmatprep.subr.bf16.mxu0 0
    %148 = vmatpush1.bf16.msra.mxu0 %v132
    %149 = vmatprep.subr.bf16.mxu0 0
    %150 = vmatpush1.bf16.msra.mxu0 0
    %151 = vmatprep.subr.bf16.mxu0 0
    %152 = vmatpush1.bf16.msra.mxu0 0
    %153 = vmatprep.subr.bf16.mxu0 0
    %154 = vmatpush1.bf16.msra.mxu0 0
    %155 = vmatprep.subr.bf16.mxu0 0
    %156 = vmatpush1.bf16.msra.mxu0 0
    %157 = vmatprep.subr.bf16.mxu0 0
    %158 = vmatpush1.bf16.msra.mxu0 0
    %159 = vmatprep.subr.bf16.mxu0 0
    %160 = vmatpush1.bf16.msra.mxu0 0
    %161 = vmatprep.subr.bf16.mxu0 0
    %162 = vmatpush1.bf16.msra.mxu0 0
    %163 = vmatprep.subr.bf16.mxu0 0
    %164 = vmatpush1.bf16.msra.mxu0 0
    %165 = vmatprep.subr.bf16.mxu0 0
    %166 = vmatpush1.bf16.msra.mxu0 0
    %167 = vmatprep.subr.bf16.mxu0 0
    %168 = vmatpush1.bf16.msra.mxu0 0
    %169 = vmatprep.subr.bf16.mxu0 0
    %170 = vmatpush1.bf16.msra.mxu0 0
    %171 = vmatprep.subr.bf16.mxu0 0
    %172 = vmatpush1.bf16.msra.mxu0 0
    %173 = vmatprep.mubr.bf16.mxu0 0
    %174 = vmatmul.mubr.bf16.gmra.mrb[0].mxu0 %v139
    %v175 = vpop.f32.mrb[0].mxu0
    %v176 = vadd.f32 0.0, %v175
    %v177 = vpop.f32.mrb[0].mxu0
    %v178 = vpop.f32.mrb[0].mxu0
    %v179 = vadd.f32 0.0, %v178
    %v180 = vpop.f32.mrb[0].mxu0
    %181 = vdwg.mxu0
    %v182 = vadd.f32 %v102, %v176
    %v183 = vadd.f32 %v103, %v179
    %184 = vst.msk [vmem:[#allocation2] sm:$0xff] %vm55, %v182
    %185 = vst.msk [vmem:[#allocation2 + $0x8] sm:$0xff] %vm55, %v183
    // Predicated region
    $region26: #{positionwise_ffn.1} parent=1 // pred_check
      %p186 = pneg %p22
    $region27: #{positionwise_ffn.1} parent=1 // pred_check_branch
      %188 = sbr.rel (%p186) target = $region29
    $region28: #{positionwise_ffn.1} parent=1 // pred_region
      %v189 = vld [vmem:[#allocation2] sm:$0xff]
      %v190 = vld [vmem:[#allocation2 + $0x8] sm:$0xff]
      %v191 = vld [vmem:[%s4] sm:$0x1]
      %v193 = vlaneseq
      %v194 = vshrl.u32 %v193, 7
      %v195 = vsub.s32 0, %v194
      %v196 = vrot.slane %v191, %v195
      %v198 = vadd.f32 %v189, %v196
      %v199 = vadd.f32 %v190, %v196
      %200 = vst.msk [vmem:[#allocation3] sm:$0xff] %vm55, %v198
      %201 = vst.msk [vmem:[#allocation3 + $0x8] sm:$0xff] %vm55, %v199
    $region29: #{positionwise_ffn.1} parent=1 // pred_fallthru
      _
    // Predicated region
    $region30: #{positionwise_ffn.1} parent=1 // pred_check
      _
    $region31: #{positionwise_ffn.1} parent=1 // pred_check_branch
      %203 = sbr.rel (0) target = $region33
    $region32: #{positionwise_ffn.1} parent=1 // pred_region
      %s205 = ssub.s32 256, 256
      %206 = vsyncadd [#allocation4], %s205
      %s207 = sshll.u32 [#allocation3], 4
      %s208 = int_to_ptr.vmem [resolvable:$true] %s207
      %213 = dma.vmem_to_hbm [thread:$0]  %s208, 256, %s5, [#allocation4], 128, 128, 8
    $region33: #{positionwise_ffn.1} parent=1 // pred_fallthru
      _
    // Predicated region
    $region34: #{positionwise_ffn.1} parent=1 // pred_check
      _
    $region35: #{positionwise_ffn.1} parent=1 // pred_check_branch
      %215 = sbr.rel (0) target = $region37
    $region36: #{positionwise_ffn.1} parent=1 // pred_region
      %216 = dma.done [#allocation4], 256
    $region37: #{positionwise_ffn.1} parent=1 // pred_fallthru
      _
    %217 = vsyncpa [#allocation4], 1

</llo_original>
